<compile_context>
chip_gen: v6e
topology: v6e:2x2x1
jax: 0.10.0
libtpu: 0.0.40
codegen_flags: <defaults>
</compile_context>

<pallas_src>
import functools

import jax
import jax.numpy as jnp
from jax.experimental import pallas as pl
from jax.experimental.pallas import tpu as pltpu

LAYER_SIZES = [93, 256, 128, 64, 32, 16, 9]
_LANE = 128          # lane-pad all feature axes to a multiple of this
_NEG = -1e30         # f32 fill for padded class-logit biases (exp underflows to 0)
_MAX_TILE_M = 512    # batch-tile cap


def _round_up(n, m):
    return ((n + m - 1) // m) * m


def mlp_softmax_kernel(x_ref, w1, w2, w3, w4, w5, w6, b_ref, o_ref, xpad,
                       *, f_in, n_classes, approx_recip):
    """Whole forward pass for one batch tile, entirely in VMEM.

    Weights are lane-padded (zero rows/cols); biases are packed into b_ref
    (row l = layer l's bias, padded class lanes of the last layer = -1e30).
    """
    # Zero-extend the 93 real feature lanes to a lane-dense 128-wide slab.
    # (Re-zeroed every step so it is correct under megacore grid sharding.)
    xpad[...] = jnp.zeros_like(xpad)
    xpad[:, :f_in] = x_ref[...].astype(jnp.float32)
    h = xpad[...]

    # Hidden layers: MXU matmul (bf16 or f32 operands, f32 accumulate),
    # f32 bias + ReLU on the VPU.  Padded lanes stay exactly zero.
    for l, w in enumerate((w1, w2, w3, w4, w5)):
        pout = w.shape[1]
        h = jnp.dot(h.astype(w.dtype), w[...], preferred_element_type=jnp.float32)
        h = jnp.maximum(h + b_ref[l:l + 1, :pout], 0.0)

    # Final layer -> f32 logits on 128 padded class lanes.  Padded lanes carry
    # a -1e30 f32 bias so they contribute exactly 0 to the softmax.
    pout = w6.shape[1]
    logits = jnp.dot(h.astype(w6.dtype), w6[...], preferred_element_type=jnp.float32)
    logits = logits + b_ref[5:6, :pout]

    # Numerically-stable softmax over the padded class axis (lane-dense reduces).
    m = jnp.max(logits, axis=-1, keepdims=True)
    e = jnp.exp(logits - m)
    denom = jnp.sum(e, axis=-1, keepdims=True)
    probs = e * pl.reciprocal(denom, approx=approx_recip)

    # Store only the 9 real classes (narrow store; avoids a wrapper-side
    # (B,128) -> (B,9) slice pass over HBM).
    o_ref[...] = probs[:, :n_classes].astype(o_ref.dtype)


def init_params(key):
    """Deterministic PyTorch-Linear-style init (uniform +- 1/sqrt(fan_in))."""
    params = []
    for i in range(len(LAYER_SIZES) - 1):
        fan_in, fan_out = LAYER_SIZES[i], LAYER_SIZES[i + 1]
        key, kw, kb = jax.random.split(key, 3)
        bound = 1.0 / jnp.sqrt(jnp.float32(fan_in))
        # Stored as (in, out): transpose of the PyTorch (out, in) weight.
        w = jax.random.uniform(kw, (fan_in, fan_out), jnp.float32, -bound, bound)
        b = jax.random.uniform(kb, (1, fan_out), jnp.float32, -bound, bound)
        params.append((w, b))
    return params


@functools.partial(jax.jit, static_argnames=("use_bf16",))
def otto_mlp_forward(x, params, use_bf16=False):
    B, F = x.shape
    assert F == LAYER_SIZES[0]
    n_classes = LAYER_SIZES[-1]
    n_layers = len(params)

    # ---- batch tiling -------------------------------------------------------
    # Balanced tiles (minimal dead rows), capped at _MAX_TILE_M, and at least
    # two grid steps once B >= 128 so the "parallel" axis can shard across both
    # TensorCores on megacore parts (v7x).  Tiny batches stay a single step.
    num_tiles = max(1, -(-B // _MAX_TILE_M))
    if B >= 128:
        num_tiles = max(num_tiles, 2)
    tile_m = _round_up(-(-B // num_tiles), 8)
    if tile_m >= B:
        tile_m = B            # single full-array tile, no batch padding at all
    grid = (-(-B // tile_m),)  # ragged last tile handled by Pallas

    wdtype = jnp.bfloat16 if use_bf16 else jnp.float32
    f_pad = _round_up(F, _LANE)

    # ---- lane-pad weights; pack all biases into one (8, 256) f32 array ------
    w_padded, w_specs = [], []
    bias_pack = jnp.zeros((8, 2 * _LANE), jnp.float32)
    macs = 0
    for l, (w, b) in enumerate(params):
        fin, fout = w.shape
        pin, pout = _round_up(fin, _LANE), _round_up(fout, _LANE)
        w_p = jnp.zeros((pin, pout), wdtype).at[:fin, :fout].set(w.astype(wdtype))
        w_padded.append(w_p)
        # Weights are resident across all batch tiles (constant index_map).
        w_specs.append(pl.BlockSpec((pin, pout), lambda i: (0, 0)))
        if l == n_layers - 1:
            bias_pack = bias_pack.at[l, :pout].set(_NEG)   # padded class lanes
        bias_pack = bias_pack.at[l, :fout].set(b[0].astype(jnp.float32))
        macs += pin * pout

    in_specs = ([pl.BlockSpec((tile_m, F), lambda i: (i, 0))]
                + w_specs
                + [pl.BlockSpec((8, 2 * _LANE), lambda i: (0, 0))])
    out_spec = pl.BlockSpec((tile_m, n_classes), lambda i: (i, 0))

    kernel = functools.partial(
        mlp_softmax_kernel, f_in=F, n_classes=n_classes,
        approx_recip=bool(use_bf16))

    itemsize = 2 if use_bf16 else 4
    cost_estimate = pl.CostEstimate(
        flops=2 * B * macs,
        transcendentals=B * _LANE,
        bytes_accessed=B * (F + n_classes) * 4 + macs * itemsize + 8 * 2 * _LANE * 4,
    )

    return pl.pallas_call(
        kernel,
        out_shape=jax.ShapeDtypeStruct((B, n_classes), jnp.float32),
        grid_spec=pltpu.PrefetchScalarGridSpec(
            num_scalar_prefetch=0,
            grid=grid,
            in_specs=in_specs,
            out_specs=out_spec,
            scratch_shapes=[pltpu.VMEM((tile_m, f_pad), jnp.float32)],
        ),
        compiler_params=pltpu.CompilerParams(
            dimension_semantics=("parallel",),
        ),
        cost_estimate=cost_estimate,
    )(x, *w_padded, bias_pack)


def reference_forward(x, params):
    h = x
    for i, (w, b) in enumerate(params):
        h = h @ w + b
        if i < len(params) - 1:
            h = jnp.maximum(h, 0.0)
    return jax.nn.softmax(h, axis=-1)


if __name__ == "__main__":
    key = jax.random.PRNGKey(0)
    k_params, k_x = jax.random.split(key)

    params = init_params(k_params)

    batch = 64                      # small batch -> single grid step
    x = jax.random.normal(k_x, (batch, 93), dtype=jnp.float32)

    ref = reference_forward(x, params)

    # f32 path: tight agreement with the f32 reference.
    out = jax.block_until_ready(otto_mlp_forward(x, params, use_bf16=False))
    assert out.shape == (batch, 9)
    assert jnp.allclose(jnp.sum(out, axis=-1), 1.0, atol=1e-5)
    assert jnp.allclose(out, ref, atol=1e-5, rtol=1e-5)

    # bf16-operand path (recommended on v6e/v7x): looser tolerance.
    out_bf16 = jax.block_until_ready(otto_mlp_forward(x, params, use_bf16=True))
    assert out_bf16.shape == (batch, 9)
    assert jnp.allclose(jnp.sum(out_bf16, axis=-1), 1.0, atol=1e-2)
    assert jnp.allclose(out_bf16, ref, atol=5e-2)

    print("KERNEL_OK")
</pallas_src>

<mosaic_0001>
module attributes {stable_mosaic.version = 11 : i64} {
  func.func @mlp_softmax_kernel(%arg0: i32, %arg1: memref<64x93xf32, #tpu.memory_space<vmem>>, %arg2: memref<128x256xf32, #tpu.memory_space<vmem>>, %arg3: memref<256x128xf32, #tpu.memory_space<vmem>>, %arg4: memref<128x128xf32, #tpu.memory_space<vmem>>, %arg5: memref<128x128xf32, #tpu.memory_space<vmem>>, %arg6: memref<128x128xf32, #tpu.memory_space<vmem>>, %arg7: memref<128x128xf32, #tpu.memory_space<vmem>>, %arg8: memref<8x256xf32, #tpu.memory_space<vmem>>, %arg9: memref<64x9xf32, #tpu.memory_space<vmem>>, %arg10: memref<64x128xf32, #tpu.memory_space<vmem>>) attributes {dimension_semantics = [#tpu.dimension_semantics<parallel>], iteration_bounds = array<i64: 1>, scalar_prefetch = 0 : i64, scratch_operands = 1 : i64, tpu.core_type = #tpu.core_type<tc>, window_params = [{transform_indices = @transform_0, window_bounds = array<i64: 64, 93>}, {pipeline_mode = #tpu.pipeline_mode<synchronous>, transform_indices = @transform_1, window_bounds = array<i64: 128, 256>}, {pipeline_mode = #tpu.pipeline_mode<synchronous>, transform_indices = @transform_2, window_bounds = array<i64: 256, 128>}, {pipeline_mode = #tpu.pipeline_mode<synchronous>, transform_indices = @transform_3, window_bounds = array<i64: 128, 128>}, {pipeline_mode = #tpu.pipeline_mode<synchronous>, transform_indices = @transform_4, window_bounds = array<i64: 128, 128>}, {pipeline_mode = #tpu.pipeline_mode<synchronous>, transform_indices = @transform_5, window_bounds = array<i64: 128, 128>}, {pipeline_mode = #tpu.pipeline_mode<synchronous>, transform_indices = @transform_6, window_bounds = array<i64: 128, 128>}, {pipeline_mode = #tpu.pipeline_mode<synchronous>, transform_indices = @transform_7, window_bounds = array<i64: 8, 256>}, {transform_indices = @transform_8, window_bounds = array<i64: 64, 9>}]} {
    %cst = arith.constant 0.000000e+00 : f32
    %0 = vector.broadcast %cst : f32 to vector<64x128xf32>
    %c0 = arith.constant 0 : index
    %c0_0 = arith.constant 0 : index
    %1 = vector.load %arg10[%c0, %c0_0] : memref<64x128xf32, #tpu.memory_space<vmem>>, vector<64x128xf32>
    tpu.vector_store %arg10[%c0, %c0_0], %0 {strides = array<i32>} : memref<64x128xf32, #tpu.memory_space<vmem>>, vector<64x128xf32>,
    %c0_1 = arith.constant 0 : index
    %c0_2 = arith.constant 0 : index
    %2 = vector.load %arg1[%c0_1, %c0_2] : memref<64x93xf32, #tpu.memory_space<vmem>>, vector<64x93xf32>
    %c0_3 = arith.constant 0 : index
    %c0_4 = arith.constant 0 : index
    %3 = vector.load %arg10[%c0_3, %c0_4] : memref<64x128xf32, #tpu.memory_space<vmem>>, vector<64x93xf32>
    tpu.vector_store %arg10[%c0_3, %c0_4], %2 {strides = array<i32>} : memref<64x128xf32, #tpu.memory_space<vmem>>, vector<64x93xf32>,
    %c0_5 = arith.constant 0 : index
    %c0_6 = arith.constant 0 : index
    %4 = vector.load %arg10[%c0_5, %c0_6] : memref<64x128xf32, #tpu.memory_space<vmem>>, vector<64x128xf32>
    %c0_7 = arith.constant 0 : index
    %c0_8 = arith.constant 0 : index
    %5 = vector.load %arg2[%c0_7, %c0_8] : memref<128x256xf32, #tpu.memory_space<vmem>>, vector<128x256xf32>
    %cst_9 = arith.constant dense<0.000000e+00> : vector<64x256xf32>
    %6 = tpu.matmul %4, %5, %cst_9 {dimension_numbers = #tpu.dot_dimension_numbers<[1], [0], [0], [1], [0, 0, 1, 1], [], []>} : vector<64x128xf32>, vector<128x256xf32>, vector<64x256xf32> -> vector<64x256xf32>
    %c0_10 = arith.constant 0 : index
    %c0_11 = arith.constant 0 : index
    %7 = vector.load %arg8[%c0_10, %c0_11] : memref<8x256xf32, #tpu.memory_space<vmem>>, vector<1x256xf32>
    %8 = vector.broadcast %7 : vector<1x256xf32> to vector<64x256xf32>
    %9 = arith.addf %6, %8 : vector<64x256xf32>
    %cst_12 = arith.constant 0.000000e+00 : f32
    %10 = vector.broadcast %cst_12 : f32 to vector<64x256xf32>
    %11 = arith.maximumf %9, %10 : vector<64x256xf32>
    %c0_13 = arith.constant 0 : index
    %c0_14 = arith.constant 0 : index
    %12 = vector.load %arg3[%c0_13, %c0_14] : memref<256x128xf32, #tpu.memory_space<vmem>>, vector<256x128xf32>
    %cst_15 = arith.constant dense<0.000000e+00> : vector<64x128xf32>
    %13 = tpu.matmul %11, %12, %cst_15 {dimension_numbers = #tpu.dot_dimension_numbers<[1], [0], [0], [1], [0, 0, 1, 1], [], []>} : vector<64x256xf32>, vector<256x128xf32>, vector<64x128xf32> -> vector<64x128xf32>
    %c1 = arith.constant 1 : index
    %c0_16 = arith.constant 0 : index
    %14 = vector.load %arg8[%c1, %c0_16] : memref<8x256xf32, #tpu.memory_space<vmem>>, vector<1x128xf32>
    %15 = vector.broadcast %14 : vector<1x128xf32> to vector<64x128xf32>
    %16 = arith.addf %13, %15 : vector<64x128xf32>
    %cst_17 = arith.constant 0.000000e+00 : f32
    %17 = vector.broadcast %cst_17 : f32 to vector<64x128xf32>
    %18 = arith.maximumf %16, %17 : vector<64x128xf32>
    %c0_18 = arith.constant 0 : index
    %c0_19 = arith.constant 0 : index
    %19 = vector.load %arg4[%c0_18, %c0_19] : memref<128x128xf32, #tpu.memory_space<vmem>>, vector<128x128xf32>
    %cst_20 = arith.constant dense<0.000000e+00> : vector<64x128xf32>
    %20 = tpu.matmul %18, %19, %cst_20 {dimension_numbers = #tpu.dot_dimension_numbers<[1], [0], [0], [1], [0, 0, 1, 1], [], []>} : vector<64x128xf32>, vector<128x128xf32>, vector<64x128xf32> -> vector<64x128xf32>
    %c2 = arith.constant 2 : index
    %c0_21 = arith.constant 0 : index
    %21 = vector.load %arg8[%c2, %c0_21] : memref<8x256xf32, #tpu.memory_space<vmem>>, vector<1x128xf32>
    %22 = vector.broadcast %21 : vector<1x128xf32> to vector<64x128xf32>
    %23 = arith.addf %20, %22 : vector<64x128xf32>
    %cst_22 = arith.constant 0.000000e+00 : f32
    %24 = vector.broadcast %cst_22 : f32 to vector<64x128xf32>
    %25 = arith.maximumf %23, %24 : vector<64x128xf32>
    %c0_23 = arith.constant 0 : index
    %c0_24 = arith.constant 0 : index
    %26 = vector.load %arg5[%c0_23, %c0_24] : memref<128x128xf32, #tpu.memory_space<vmem>>, vector<128x128xf32>
    %cst_25 = arith.constant dense<0.000000e+00> : vector<64x128xf32>
    %27 = tpu.matmul %25, %26, %cst_25 {dimension_numbers = #tpu.dot_dimension_numbers<[1], [0], [0], [1], [0, 0, 1, 1], [], []>} : vector<64x128xf32>, vector<128x128xf32>, vector<64x128xf32> -> vector<64x128xf32>
    %c3 = arith.constant 3 : index
    %c0_26 = arith.constant 0 : index
    %28 = vector.load %arg8[%c3, %c0_26] : memref<8x256xf32, #tpu.memory_space<vmem>>, vector<1x128xf32>
    %29 = vector.broadcast %28 : vector<1x128xf32> to vector<64x128xf32>
    %30 = arith.addf %27, %29 : vector<64x128xf32>
    %cst_27 = arith.constant 0.000000e+00 : f32
    %31 = vector.broadcast %cst_27 : f32 to vector<64x128xf32>
    %32 = arith.maximumf %30, %31 : vector<64x128xf32>
    %c0_28 = arith.constant 0 : index
    %c0_29 = arith.constant 0 : index
    %33 = vector.load %arg6[%c0_28, %c0_29] : memref<128x128xf32, #tpu.memory_space<vmem>>, vector<128x128xf32>
    %cst_30 = arith.constant dense<0.000000e+00> : vector<64x128xf32>
    %34 = tpu.matmul %32, %33, %cst_30 {dimension_numbers = #tpu.dot_dimension_numbers<[1], [0], [0], [1], [0, 0, 1, 1], [], []>} : vector<64x128xf32>, vector<128x128xf32>, vector<64x128xf32> -> vector<64x128xf32>
    %c4 = arith.constant 4 : index
    %c0_31 = arith.constant 0 : index
    %35 = vector.load %arg8[%c4, %c0_31] : memref<8x256xf32, #tpu.memory_space<vmem>>, vector<1x128xf32>
    %36 = vector.broadcast %35 : vector<1x128xf32> to vector<64x128xf32>
    %37 = arith.addf %34, %36 : vector<64x128xf32>
    %cst_32 = arith.constant 0.000000e+00 : f32
    %38 = vector.broadcast %cst_32 : f32 to vector<64x128xf32>
    %39 = arith.maximumf %37, %38 : vector<64x128xf32>
    %c0_33 = arith.constant 0 : index
    %c0_34 = arith.constant 0 : index
    %40 = vector.load %arg7[%c0_33, %c0_34] : memref<128x128xf32, #tpu.memory_space<vmem>>, vector<128x128xf32>
    %cst_35 = arith.constant dense<0.000000e+00> : vector<64x128xf32>
    %41 = tpu.matmul %39, %40, %cst_35 {dimension_numbers = #tpu.dot_dimension_numbers<[1], [0], [0], [1], [0, 0, 1, 1], [], []>} : vector<64x128xf32>, vector<128x128xf32>, vector<64x128xf32> -> vector<64x128xf32>
    %c5 = arith.constant 5 : index
    %c0_36 = arith.constant 0 : index
    %42 = vector.load %arg8[%c5, %c0_36] : memref<8x256xf32, #tpu.memory_space<vmem>>, vector<1x128xf32>
    %43 = vector.broadcast %42 : vector<1x128xf32> to vector<64x128xf32>
    %44 = arith.addf %41, %43 : vector<64x128xf32>
    %cst_37 = arith.constant dense<0xFF800000> : vector<64xf32>
    %45 = vector.multi_reduction <maximumf>, %44, %cst_37 [1] : vector<64x128xf32> to vector<64xf32>
    %46 = vector.shape_cast %45 : vector<64xf32> to vector<64x1xf32>
    %47 = vector.broadcast %46 : vector<64x1xf32> to vector<64x128xf32>
    %48 = arith.subf %44, %47 : vector<64x128xf32>
    %49 = math.exp %48 : vector<64x128xf32>
    %cst_38 = arith.constant dense<0.000000e+00> : vector<64xf32>
    %50 = vector.multi_reduction <add>, %49, %cst_38 [1] : vector<64x128xf32> to vector<64xf32>
    %51 = vector.shape_cast %50 : vector<64xf32> to vector<64x1xf32>
    %52 = tpu.reciprocal %51 : vector<64x1xf32> -> vector<64x1xf32>
    %53 = vector.broadcast %52 : vector<64x1xf32> to vector<64x128xf32>
    %54 = arith.mulf %49, %53 : vector<64x128xf32>
    %55 = vector.extract_strided_slice %54 {offsets = [0, 0], sizes = [64, 9], strides = [1, 1]} : vector<64x128xf32> to vector<64x9xf32>
    %c0_39 = arith.constant 0 : index
    %c0_40 = arith.constant 0 : index
    %56 = vector.load %arg9[%c0_39, %c0_40] : memref<64x9xf32, #tpu.memory_space<vmem>>, vector<64x9xf32>
    tpu.vector_store %arg9[%c0_39, %c0_40], %55 {strides = array<i32>} : memref<64x9xf32, #tpu.memory_space<vmem>>, vector<64x9xf32>,
    return
  }
  func.func @transform_0(%arg0: i32) -> (i32, i32) {
    %c0_i32 = arith.constant 0 : i32
    %c0_i32_0 = arith.constant 0 : i32
    return %arg0, %c0_i32 : i32, i32
  }
  func.func @transform_1(%arg0: i32) -> (i32, i32) {
    %c0_i32 = arith.constant 0 : i32
    %c0_i32_0 = arith.constant 0 : i32
    %c0_i32_1 = arith.constant 0 : i32
    return %c0_i32, %c0_i32_0 : i32, i32
  }
  func.func @transform_2(%arg0: i32) -> (i32, i32) {
    %c0_i32 = arith.constant 0 : i32
    %c0_i32_0 = arith.constant 0 : i32
    %c0_i32_1 = arith.constant 0 : i32
    return %c0_i32, %c0_i32_0 : i32, i32
  }
  func.func @transform_3(%arg0: i32) -> (i32, i32) {
    %c0_i32 = arith.constant 0 : i32
    %c0_i32_0 = arith.constant 0 : i32
    %c0_i32_1 = arith.constant 0 : i32
    return %c0_i32, %c0_i32_0 : i32, i32
  }
  func.func @transform_4(%arg0: i32) -> (i32, i32) {
    %c0_i32 = arith.constant 0 : i32
    %c0_i32_0 = arith.constant 0 : i32
    %c0_i32_1 = arith.constant 0 : i32
    return %c0_i32, %c0_i32_0 : i32, i32
  }
  func.func @transform_5(%arg0: i32) -> (i32, i32) {
    %c0_i32 = arith.constant 0 : i32
    %c0_i32_0 = arith.constant 0 : i32
    %c0_i32_1 = arith.constant 0 : i32
    return %c0_i32, %c0_i32_0 : i32, i32
  }
  func.func @transform_6(%arg0: i32) -> (i32, i32) {
    %c0_i32 = arith.constant 0 : i32
    %c0_i32_0 = arith.constant 0 : i32
    %c0_i32_1 = arith.constant 0 : i32
    return %c0_i32, %c0_i32_0 : i32, i32
  }
  func.func @transform_7(%arg0: i32) -> (i32, i32) {
    %c0_i32 = arith.constant 0 : i32
    %c0_i32_0 = arith.constant 0 : i32
    %c0_i32_1 = arith.constant 0 : i32
    return %c0_i32, %c0_i32_0 : i32, i32
  }
  func.func @transform_8(%arg0: i32) -> (i32, i32) {
    %c0_i32 = arith.constant 0 : i32
    %c0_i32_0 = arith.constant 0 : i32
    return %arg0, %c0_i32 : i32, i32
  }
}

</mosaic_0001>

<llo_original>
// kernel: otto_mlp_forward.1
$region0: #{otto_mlp_forward.1}
  #allocation0 [shape = 'u32[]', space=smem, size = 0x4, offset = 0x4, fixed_abs, tag = 'smem constant byte address 0x4 - core index']
  #allocation1 [shape = 'u32[144,128]{1,0:T(1,128)}', space=vmem, size = 0x12000, scoped, tag = 'internal scratch']
  #allocation2 [shape = 'f32[64,128]{1,0:T(8,128)}', space=vmem, size = 0x8000, scoped, tag = 'scratch operand']
  %s0 = inlined_call_operand.vmem [shape: f32[64,93], index: 0, kind: input, shape index: {}]
  %s1 = inlined_call_operand.vmem [shape: f32[128,256], index: 1, kind: input, shape index: {}]
  %s2 = inlined_call_operand.vmem [shape: f32[256,128], index: 2, kind: input, shape index: {}]
  %s3 = inlined_call_operand.vmem [shape: f32[128,128], index: 3, kind: input, shape index: {}]
  %s4 = inlined_call_operand.vmem [shape: f32[128,128], index: 4, kind: input, shape index: {}]
  %s5 = inlined_call_operand.vmem [shape: f32[128,128], index: 5, kind: input, shape index: {}]
  %s6 = inlined_call_operand.vmem [shape: f32[128,128], index: 6, kind: input, shape index: {}]
  %s7 = inlined_call_operand.vmem [shape: f32[8,256], index: 7, kind: input, shape index: {}]
  %s8 = inlined_call_operand.vmem [shape: f32[64,9], index: 8, kind: output, shape index: {}]
  %s9 = sld [smem:[#allocation0]]
  $region42: #{otto_mlp_forward.1} parent=0
    _
  %s11 = ssub.s32 1, %s9
  %s12 = scalar_select 0, %s11, %s9
  // Predicated region
  $region2: #{otto_mlp_forward.1} parent=0 // pred_check
    _
  $region3: #{otto_mlp_forward.1} parent=0 // pred_check_branch
    %14 = sbr.rel (0) target = $region5
  $region4: #{otto_mlp_forward.1} parent=0 // pred_region
    _
  $region5: #{otto_mlp_forward.1} parent=0 // pred_fallthru
    _
  // Predicated region
  $region6: #{otto_mlp_forward.1} parent=0 // pred_check
    _
  $region7: #{otto_mlp_forward.1} parent=0 // pred_check_branch
    %16 = sbr.rel (0) target = $region9
  $region8: #{otto_mlp_forward.1} parent=0 // pred_region
    _
  $region9: #{otto_mlp_forward.1} parent=0 // pred_fallthru
    _
  // Predicated region
  $region10: #{otto_mlp_forward.1} parent=0 // pred_check
    _
  $region11: #{otto_mlp_forward.1} parent=0 // pred_check_branch
    %18 = sbr.rel (0) target = $region13
  $region12: #{otto_mlp_forward.1} parent=0 // pred_region
    _
  $region13: #{otto_mlp_forward.1} parent=0 // pred_fallthru
    _
  // Predicated region
  $region14: #{otto_mlp_forward.1} parent=0 // pred_check
    _
  $region15: #{otto_mlp_forward.1} parent=0 // pred_check_branch
    %20 = sbr.rel (0) target = $region17
  $region16: #{otto_mlp_forward.1} parent=0 // pred_region
    _
  $region17: #{otto_mlp_forward.1} parent=0 // pred_fallthru
    _
  // Predicated region
  $region18: #{otto_mlp_forward.1} parent=0 // pred_check
    _
  $region19: #{otto_mlp_forward.1} parent=0 // pred_check_branch
    %22 = sbr.rel (0) target = $region21
  $region20: #{otto_mlp_forward.1} parent=0 // pred_region
    _
  $region21: #{otto_mlp_forward.1} parent=0 // pred_fallthru
    _
  // Predicated region
  $region22: #{otto_mlp_forward.1} parent=0 // pred_check
    _
  $region23: #{otto_mlp_forward.1} parent=0 // pred_check_branch
    %24 = sbr.rel (0) target = $region25
  $region24: #{otto_mlp_forward.1} parent=0 // pred_region
    _
  $region25: #{otto_mlp_forward.1} parent=0 // pred_fallthru
    _
  // Predicated region
  $region26: #{otto_mlp_forward.1} parent=0 // pred_check
    _
  $region27: #{otto_mlp_forward.1} parent=0 // pred_check_branch
    %26 = sbr.rel (0) target = $region29
  $region28: #{otto_mlp_forward.1} parent=0 // pred_region
    _
  $region29: #{otto_mlp_forward.1} parent=0 // pred_fallthru
    _
  // Predicated region
  $region30: #{otto_mlp_forward.1} parent=0 // pred_check
    _
  $region31: #{otto_mlp_forward.1} parent=0 // pred_check_branch
    %28 = sbr.rel (0) target = $region33
  $region32: #{otto_mlp_forward.1} parent=0 // pred_region
    _
  $region33: #{otto_mlp_forward.1} parent=0 // pred_fallthru
    _
  %29 = vst [vmem:[#allocation2] sm:$0xff] 0.0
  %30 = vst [vmem:[#allocation2 + $0x8] sm:$0xff] 0.0
  %31 = vst [vmem:[#allocation2 + $0x10] sm:$0xff] 0.0
  %32 = vst [vmem:[#allocation2 + $0x18] sm:$0xff] 0.0
  %33 = vst [vmem:[#allocation2 + $0x20] sm:$0xff] 0.0
  %34 = vst [vmem:[#allocation2 + $0x28] sm:$0xff] 0.0
  %35 = vst [vmem:[#allocation2 + $0x30] sm:$0xff] 0.0
  %36 = vst [vmem:[#allocation2 + $0x38] sm:$0xff] 0.0
  %v37 = vld [vmem:[%s0] sm:$0xff]
  %v38 = vld [vmem:[%s0 + $0x8] sm:$0xff]
  %v39 = vld [vmem:[%s0 + $0x10] sm:$0xff]
  %v40 = vld [vmem:[%s0 + $0x18] sm:$0xff]
  %v41 = vld [vmem:[%s0 + $0x20] sm:$0xff]
  %v42 = vld [vmem:[%s0 + $0x28] sm:$0xff]
  %v43 = vld [vmem:[%s0 + $0x30] sm:$0xff]
  %v44 = vld [vmem:[%s0 + $0x38] sm:$0xff]
  %vm45 = vcmask 760832
  %46 = vst.msk [vmem:[#allocation2] sm:$0xff] %vm45, %v37
  %47 = vst.msk [vmem:[#allocation2 + $0x8] sm:$0xff] %vm45, %v38
  %48 = vst.msk [vmem:[#allocation2 + $0x10] sm:$0xff] %vm45, %v39
  %49 = vst.msk [vmem:[#allocation2 + $0x18] sm:$0xff] %vm45, %v40
  %50 = vst.msk [vmem:[#allocation2 + $0x20] sm:$0xff] %vm45, %v41
  %51 = vst.msk [vmem:[#allocation2 + $0x28] sm:$0xff] %vm45, %v42
  %52 = vst.msk [vmem:[#allocation2 + $0x30] sm:$0xff] %vm45, %v43
  %53 = vst.msk [vmem:[#allocation2 + $0x38] sm:$0xff] %vm45, %v44
  %v54 = vld [vmem:[#allocation2] sm:$0xff]
  %v55 = vld [vmem:[#allocation2 + $0x8] sm:$0xff]
  %v56 = vld [vmem:[#allocation2 + $0x10] sm:$0xff]
  %v57 = vld [vmem:[#allocation2 + $0x18] sm:$0xff]
  %v58 = vld [vmem:[#allocation2 + $0x20] sm:$0xff]
  %v59 = vld [vmem:[#allocation2 + $0x28] sm:$0xff]
  %v60 = vld [vmem:[#allocation2 + $0x30] sm:$0xff]
  %v61 = vld [vmem:[#allocation2 + $0x38] sm:$0xff]
  %v62 = vld [vmem:[%s1] sm:$0xff]
  %v63 = vld [vmem:[%s1 + $0x8] sm:$0xff]
  %v64 = vld [vmem:[%s1 + $0x10] sm:$0xff]
  %v65 = vld [vmem:[%s1 + $0x18] sm:$0xff]
  %v66 = vld [vmem:[%s1 + $0x20] sm:$0xff]
  %v67 = vld [vmem:[%s1 + $0x28] sm:$0xff]
  %v68 = vld [vmem:[%s1 + $0x30] sm:$0xff]
  %v69 = vld [vmem:[%s1 + $0x38] sm:$0xff]
  %v70 = vld [vmem:[%s1 + $0x40] sm:$0xff]
  %v71 = vld [vmem:[%s1 + $0x48] sm:$0xff]
  %v72 = vld [vmem:[%s1 + $0x50] sm:$0xff]
  %v73 = vld [vmem:[%s1 + $0x58] sm:$0xff]
  %v74 = vld [vmem:[%s1 + $0x60] sm:$0xff]
  %v75 = vld [vmem:[%s1 + $0x68] sm:$0xff]
  %v76 = vld [vmem:[%s1 + $0x70] sm:$0xff]
  %v77 = vld [vmem:[%s1 + $0x78] sm:$0xff]
  %v78 = vld [vmem:[%s1 + $0x80] sm:$0xff]
  %v79 = vld [vmem:[%s1 + $0x88] sm:$0xff]
  %v80 = vld [vmem:[%s1 + $0x90] sm:$0xff]
  %v81 = vld [vmem:[%s1 + $0x98] sm:$0xff]
  %v82 = vld [vmem:[%s1 + $0xa0] sm:$0xff]
  %v83 = vld [vmem:[%s1 + $0xa8] sm:$0xff]
  %v84 = vld [vmem:[%s1 + $0xb0] sm:$0xff]
  %v85 = vld [vmem:[%s1 + $0xb8] sm:$0xff]
  %v86 = vld [vmem:[%s1 + $0xc0] sm:$0xff]
  %v87 = vld [vmem:[%s1 + $0xc8] sm:$0xff]
  %v88 = vld [vmem:[%s1 + $0xd0] sm:$0xff]
  %v89 = vld [vmem:[%s1 + $0xd8] sm:$0xff]
  %v90 = vld [vmem:[%s1 + $0xe0] sm:$0xff]
  %v91 = vld [vmem:[%s1 + $0xe8] sm:$0xff]
  %v92 = vld [vmem:[%s1 + $0xf0] sm:$0xff]
  %v93 = vld [vmem:[%s1 + $0xf8] sm:$0xff]
  %v94 = vld [vmem:[%s7] ss:$8 sm:$0x3]
  %v96 = vlaneseq
  %v97 = vshrl.u32 %v96, 7
  %v98 = vsub.s32 0, %v97
  %v99 = vrot.slane %v94, %v98
  %v100 = vlaneseq
  %v101 = vshrl.u32 %v100, 7
  %v102 = vsub.s32 1, %v101
  %v103 = vrot.slane %v94, %v102
  %106 = vmatprep.subr.mxu0 %v93
  %107 = vmatpush1.msra.mxu0 %v92
  %108 = vmatprep.subr.mxu0 %v91
  %109 = vmatpush1.msra.mxu0 %v90
  %110 = vmatprep.subr.mxu0 %v89
  %111 = vmatpush1.msra.mxu0 %v88
  %112 = vmatprep.subr.mxu0 %v87
  %113 = vmatpush1.msra.mxu0 %v86
  %114 = vmatprep.subr.mxu0 %v85
  %115 = vmatpush1.msra.mxu0 %v84
  %116 = vmatprep.subr.mxu0 %v83
  %117 = vmatpush1.msra.mxu0 %v82
  %118 = vmatprep.subr.mxu0 %v81
  %119 = vmatpush1.msra.mxu0 %v80
  %120 = vmatprep.subr.mxu0 %v79
  %121 = vmatpush1.msra.mxu0 %v78
  %122 = vmatprep.subr.mxu0 %v77
  %123 = vmatpush1.msra.mxu0 %v76
  %124 = vmatprep.subr.mxu0 %v75
  %125 = vmatpush1.msra.mxu0 %v74
  %126 = vmatprep.subr.mxu0 %v73
  %127 = vmatpush1.msra.mxu0 %v72
  %128 = vmatprep.subr.mxu0 %v71
  %129 = vmatpush1.msra.mxu0 %v70
  %130 = vmatprep.subr.mxu0 %v69
  %131 = vmatpush1.msra.mxu0 %v68
  %132 = vmatprep.subr.mxu0 %v67
  %133 = vmatpush1.msra.mxu0 %v66
  %134 = vmatprep.subr.mxu0 %v65
  %135 = vmatpush1.msra.mxu0 %v64
  %136 = vmatprep.subr.mxu0 %v63
  %137 = vmatpush1.msra.mxu0 %v62
  %138 = vmatprep.subr.mxu0 0.0
  %139 = vmatpush2.msra.mxu0 0.0
  %140 = vmatprep.subr.mxu0 0.0
  %141 = vmatpush2.msra.mxu0 0.0
  %142 = vmatprep.subr.mxu0 0.0
  %143 = vmatpush2.msra.mxu0 0.0
  %144 = vmatprep.subr.mxu0 0.0
  %145 = vmatpush2.msra.mxu0 0.0
  %146 = vmatprep.subr.mxu0 0.0
  %147 = vmatpush2.msra.mxu0 0.0
  %148 = vmatprep.subr.mxu0 0.0
  %149 = vmatpush2.msra.mxu0 0.0
  %150 = vmatprep.subr.mxu0 0.0
  %151 = vmatpush2.msra.mxu0 0.0
  %152 = vmatprep.subr.mxu0 0.0
  %153 = vmatpush2.msra.mxu0 0.0
  %154 = vmatprep.subr.mxu0 0.0
  %155 = vmatpush2.msra.mxu0 0.0
  %156 = vmatprep.subr.mxu0 0.0
  %157 = vmatpush2.msra.mxu0 0.0
  %158 = vmatprep.subr.mxu0 0.0
  %159 = vmatpush2.msra.mxu0 0.0
  %160 = vmatprep.subr.mxu0 0.0
  %161 = vmatpush2.msra.mxu0 0.0
  %162 = vmatprep.subr.mxu0 0.0
  %163 = vmatpush2.msra.mxu0 0.0
  %164 = vmatprep.subr.mxu0 0.0
  %165 = vmatpush2.msra.mxu0 0.0
  %166 = vmatprep.subr.mxu0 0.0
  %167 = vmatpush2.msra.mxu0 0.0
  %168 = vmatprep.subr.mxu0 0.0
  %169 = vmatpush2.msra.mxu0 0.0
  %170 = vmatprep.mubr.f32.mxu0 0.0
  %171 = vmatmul.mubr.f32.gmra.mxu0 %v54
  %v172 = vpop.f32.mrf.mxu0
  %v173 = vadd.f32 %v99, %v172
  %v174 = vpop.f32.mrf.mxu0
  %v175 = vadd.f32 %v103, %v174
  %176 = vmatprep.mubr.f32.mxu0 0.0
  %177 = vmatmul.mubr.f32.gmra.mxu0 %v55
  %v178 = vpop.f32.mrf.mxu0
  %v179 = vadd.f32 %v99, %v178
  %v180 = vpop.f32.mrf.mxu0
  %v181 = vadd.f32 %v103, %v180
  %182 = vmatprep.mubr.f32.mxu0 0.0
  %183 = vmatmul.mubr.f32.gmra.mxu0 %v56
  %v184 = vpop.f32.mrf.mxu0
  %v185 = vadd.f32 %v99, %v184
  %v186 = vpop.f32.mrf.mxu0
  %v187 = vadd.f32 %v103, %v186
  %188 = vmatprep.mubr.f32.mxu0 0.0
  %189 = vmatmul.mubr.f32.gmra.mxu0 %v57
  %v190 = vpop.f32.mrf.mxu0
  %v191 = vadd.f32 %v99, %v190
  %v192 = vpop.f32.mrf.mxu0
  %v193 = vadd.f32 %v103, %v192
  %194 = vmatprep.mubr.f32.mxu0 0.0
  %195 = vmatmul.mubr.f32.gmra.mxu0 %v58
  %v196 = vpop.f32.mrf.mxu0
  %v197 = vadd.f32 %v99, %v196
  %v198 = vpop.f32.mrf.mxu0
  %v199 = vadd.f32 %v103, %v198
  %200 = vmatprep.mubr.f32.mxu0 0.0
  %201 = vmatmul.mubr.f32.gmra.mxu0 %v59
  %v202 = vpop.f32.mrf.mxu0
  %v203 = vadd.f32 %v99, %v202
  %v204 = vpop.f32.mrf.mxu0
  %v205 = vadd.f32 %v103, %v204
  %206 = vmatprep.mubr.f32.mxu0 0.0
  %207 = vmatmul.mubr.f32.gmra.mxu0 %v60
  %v208 = vpop.f32.mrf.mxu0
  %v209 = vadd.f32 %v99, %v208
  %v210 = vpop.f32.mrf.mxu0
  %v211 = vadd.f32 %v103, %v210
  %212 = vmatprep.mubr.f32.mxu0 0.0
  %213 = vmatmul.mubr.f32.gmra.mxu0 %v61
  %v214 = vpop.f32.mrf.mxu0
  %v215 = vadd.f32 %v99, %v214
  %v216 = vpop.f32.mrf.mxu0
  %v217 = vadd.f32 %v103, %v216
  %218 = vdwg.mxu0
  %v219 = vmax.f32 %v173, 0.0
  %v220 = vmax.f32 %v175, 0.0
  %v221 = vmax.f32 %v179, 0.0
  %v222 = vmax.f32 %v181, 0.0
  %v223 = vmax.f32 %v185, 0.0
  %v224 = vmax.f32 %v187, 0.0
  %v225 = vmax.f32 %v191, 0.0
  %v226 = vmax.f32 %v193, 0.0
  %v227 = vmax.f32 %v197, 0.0
  %v228 = vmax.f32 %v199, 0.0
  %v229 = vmax.f32 %v203, 0.0
  %v230 = vmax.f32 %v205, 0.0
  %v231 = vmax.f32 %v209, 0.0
  %v232 = vmax.f32 %v211, 0.0
  %v233 = vmax.f32 %v215, 0.0
  %v234 = vmax.f32 %v217, 0.0
  %v235 = vld [vmem:[%s2] sm:$0xff]
  %v236 = vld [vmem:[%s2 + $0x8] sm:$0xff]
  %v237 = vld [vmem:[%s2 + $0x10] sm:$0xff]
  %v238 = vld [vmem:[%s2 + $0x18] sm:$0xff]
  %v239 = vld [vmem:[%s2 + $0x20] sm:$0xff]
  %v240 = vld [vmem:[%s2 + $0x28] sm:$0xff]
  %v241 = vld [vmem:[%s2 + $0x30] sm:$0xff]
  %v242 = vld [vmem:[%s2 + $0x38] sm:$0xff]
  %v243 = vld [vmem:[%s2 + $0x40] sm:$0xff]
  %v244 = vld [vmem:[%s2 + $0x48] sm:$0xff]
  %v245 = vld [vmem:[%s2 + $0x50] sm:$0xff]
  %v246 = vld [vmem:[%s2 + $0x58] sm:$0xff]
  %v247 = vld [vmem:[%s2 + $0x60] sm:$0xff]
  %v248 = vld [vmem:[%s2 + $0x68] sm:$0xff]
  %v249 = vld [vmem:[%s2 + $0x70] sm:$0xff]
  %v250 = vld [vmem:[%s2 + $0x78] sm:$0xff]
  %v251 = vld [vmem:[%s2 + $0x80] sm:$0xff]
  %v252 = vld [vmem:[%s2 + $0x88] sm:$0xff]
  %v253 = vld [vmem:[%s2 + $0x90] sm:$0xff]
  %v254 = vld [vmem:[%s2 + $0x98] sm:$0xff]
  %v255 = vld [vmem:[%s2 + $0xa0] sm:$0xff]
  %v256 = vld [vmem:[%s2 + $0xa8] sm:$0xff]
  %v257 = vld [vmem:[%s2 + $0xb0] sm:$0xff]
  %v258 = vld [vmem:[%s2 + $0xb8] sm:$0xff]
  %v259 = vld [vmem:[%s2 + $0xc0] sm:$0xff]
  %v260 = vld [vmem:[%s2 + $0xc8] sm:$0xff]
  %v261 = vld [vmem:[%s2 + $0xd0] sm:$0xff]
  %v262 = vld [vmem:[%s2 + $0xd8] sm:$0xff]
  %v263 = vld [vmem:[%s2 + $0xe0] sm:$0xff]
  %v264 = vld [vmem:[%s2 + $0xe8] sm:$0xff]
  %v265 = vld [vmem:[%s2 + $0xf0] sm:$0xff]
  %v266 = vld [vmem:[%s2 + $0xf8] sm:$0xff]
  %v267 = vld [vmem:[%s7 + $0x1] ss:$0 sm:$0xff]
  %268 = vmatprep.subr.mxu0 0.0
  %269 = vmatpush1.msra.mxu0 %v250
  %270 = vmatprep.subr.mxu0 0.0
  %271 = vmatpush1.msra.mxu0 %v249
  %272 = vmatprep.subr.mxu0 0.0
  %273 = vmatpush1.msra.mxu0 %v248
  %274 = vmatprep.subr.mxu0 0.0
  %275 = vmatpush1.msra.mxu0 %v247
  %276 = vmatprep.subr.mxu0 0.0
  %277 = vmatpush1.msra.mxu0 %v246
  %278 = vmatprep.subr.mxu0 0.0
  %279 = vmatpush1.msra.mxu0 %v245
  %280 = vmatprep.subr.mxu0 0.0
  %281 = vmatpush1.msra.mxu0 %v244
  %282 = vmatprep.subr.mxu0 0.0
  %283 = vmatpush1.msra.mxu0 %v243
  %284 = vmatprep.subr.mxu0 0.0
  %285 = vmatpush1.msra.mxu0 %v242
  %286 = vmatprep.subr.mxu0 0.0
  %287 = vmatpush1.msra.mxu0 %v241
  %288 = vmatprep.subr.mxu0 0.0
  %289 = vmatpush1.msra.mxu0 %v240
  %290 = vmatprep.subr.mxu0 0.0
  %291 = vmatpush1.msra.mxu0 %v239
  %292 = vmatprep.subr.mxu0 0.0
  %293 = vmatpush1.msra.mxu0 %v238
  %294 = vmatprep.subr.mxu0 0.0
  %295 = vmatpush1.msra.mxu0 %v237
  %296 = vmatprep.subr.mxu0 0.0
  %297 = vmatpush1.msra.mxu0 %v236
  %298 = vmatprep.subr.mxu0 0.0
  %299 = vmatpush1.msra.mxu0 %v235
  %300 = vmatprep.subr.mxu0 0.0
  %301 = vmatpush2.msra.mxu0 %v266
  %302 = vmatprep.subr.mxu0 0.0
  %303 = vmatpush2.msra.mxu0 %v265
  %304 = vmatprep.subr.mxu0 0.0
  %305 = vmatpush2.msra.mxu0 %v264
  %306 = vmatprep.subr.mxu0 0.0
  %307 = vmatpush2.msra.mxu0 %v263
  %308 = vmatprep.subr.mxu0 0.0
  %309 = vmatpush2.msra.mxu0 %v262
  %310 = vmatprep.subr.mxu0 0.0
  %311 = vmatpush2.msra.mxu0 %v261
  %312 = vmatprep.subr.mxu0 0.0
  %313 = vmatpush2.msra.mxu0 %v260
  %314 = vmatprep.subr.mxu0 0.0
  %315 = vmatpush2.msra.mxu0 %v259
  %316 = vmatprep.subr.mxu0 0.0
  %317 = vmatpush2.msra.mxu0 %v258
  %318 = vmatprep.subr.mxu0 0.0
  %319 = vmatpush2.msra.mxu0 %v257
  %320 = vmatprep.subr.mxu0 0.0
  %321 = vmatpush2.msra.mxu0 %v256
  %322 = vmatprep.subr.mxu0 0.0
  %323 = vmatpush2.msra.mxu0 %v255
  %324 = vmatprep.subr.mxu0 0.0
  %325 = vmatpush2.msra.mxu0 %v254
  %326 = vmatprep.subr.mxu0 0.0
  %327 = vmatpush2.msra.mxu0 %v253
  %328 = vmatprep.subr.mxu0 0.0
  %329 = vmatpush2.msra.mxu0 %v252
  %330 = vmatprep.subr.mxu0 0.0
  %331 = vmatpush2.msra.mxu0 %v251
  %332 = vmatprep.mubr.f32.mxu0 %v220
  %333 = vmatmul.mubr.f32.gmra.mxu0 %v219
  %v334 = vpop.f32.mrf.mxu0
  %v335 = vadd.f32 %v267, %v334
  %v336 = vpop.f32.mrf.mxu0
  %337 = vmatprep.mubr.f32.mxu0 %v222
  %338 = vmatmul.mubr.f32.gmra.mxu0 %v221
  %v339 = vpop.f32.mrf.mxu0
  %v340 = vadd.f32 %v267, %v339
  %v341 = vpop.f32.mrf.mxu0
  %342 = vmatprep.mubr.f32.mxu0 %v224
  %343 = vmatmul.mubr.f32.gmra.mxu0 %v223
  %v344 = vpop.f32.mrf.mxu0
  %v345 = vadd.f32 %v267, %v344
  %v346 = vpop.f32.mrf.mxu0
  %347 = vmatprep.mubr.f32.mxu0 %v226
  %348 = vmatmul.mubr.f32.gmra.mxu0 %v225
  %v349 = vpop.f32.mrf.mxu0
  %v350 = vadd.f32 %v267, %v349
  %v351 = vpop.f32.mrf.mxu0
  %352 = vmatprep.mubr.f32.mxu0 %v228
  %353 = vmatmul.mubr.f32.gmra.mxu0 %v227
  %v354 = vpop.f32.mrf.mxu0
  %v355 = vadd.f32 %v267, %v354
  %v356 = vpop.f32.mrf.mxu0
  %357 = vmatprep.mubr.f32.mxu0 %v230
  %358 = vmatmul.mubr.f32.gmra.mxu0 %v229
  %v359 = vpop.f32.mrf.mxu0
  %v360 = vadd.f32 %v267, %v359
  %v361 = vpop.f32.mrf.mxu0
  %362 = vmatprep.mubr.f32.mxu0 %v232
  %363 = vmatmul.mubr.f32.gmra.mxu0 %v231
  %v364 = vpop.f32.mrf.mxu0
  %v365 = vadd.f32 %v267, %v364
  %v366 = vpop.f32.mrf.mxu0
  %367 = vmatprep.mubr.f32.mxu0 %v234
  %368 = vmatmul.mubr.f32.gmra.mxu0 %v233
  %v369 = vpop.f32.mrf.mxu0
  %v370 = vadd.f32 %v267, %v369
  %v371 = vpop.f32.mrf.mxu0
  %372 = vdwg.mxu0
  %v373 = vmax.f32 %v335, 0.0
  %v374 = vmax.f32 %v340, 0.0
  %v375 = vmax.f32 %v345, 0.0
  %v376 = vmax.f32 %v350, 0.0
  %v377 = vmax.f32 %v355, 0.0
  %v378 = vmax.f32 %v360, 0.0
  %v379 = vmax.f32 %v365, 0.0
  %v380 = vmax.f32 %v370, 0.0
  %v381 = vld [vmem:[%s3] sm:$0xff]
  %v382 = vld [vmem:[%s3 + $0x8] sm:$0xff]
  %v383 = vld [vmem:[%s3 + $0x10] sm:$0xff]
  %v384 = vld [vmem:[%s3 + $0x18] sm:$0xff]
  %v385 = vld [vmem:[%s3 + $0x20] sm:$0xff]
  %v386 = vld [vmem:[%s3 + $0x28] sm:$0xff]
  %v387 = vld [vmem:[%s3 + $0x30] sm:$0xff]
  %v388 = vld [vmem:[%s3 + $0x38] sm:$0xff]
  %v389 = vld [vmem:[%s3 + $0x40] sm:$0xff]
  %v390 = vld [vmem:[%s3 + $0x48] sm:$0xff]
  %v391 = vld [vmem:[%s3 + $0x50] sm:$0xff]
  %v392 = vld [vmem:[%s3 + $0x58] sm:$0xff]
  %v393 = vld [vmem:[%s3 + $0x60] sm:$0xff]
  %v394 = vld [vmem:[%s3 + $0x68] sm:$0xff]
  %v395 = vld [vmem:[%s3 + $0x70] sm:$0xff]
  %v396 = vld [vmem:[%s3 + $0x78] sm:$0xff]
  %v397 = vld [vmem:[%s7 + $0x2] ss:$0 sm:$0xff]
  %398 = vmatprep.subr.mxu0 0.0
  %399 = vmatpush1.msra.mxu0 %v396
  %400 = vmatprep.subr.mxu0 0.0
  %401 = vmatpush1.msra.mxu0 %v395
  %402 = vmatprep.subr.mxu0 0.0
  %403 = vmatpush1.msra.mxu0 %v394
  %404 = vmatprep.subr.mxu0 0.0
  %405 = vmatpush1.msra.mxu0 %v393
  %406 = vmatprep.subr.mxu0 0.0
  %407 = vmatpush1.msra.mxu0 %v392
  %408 = vmatprep.subr.mxu0 0.0
  %409 = vmatpush1.msra.mxu0 %v391
  %410 = vmatprep.subr.mxu0 0.0
  %411 = vmatpush1.msra.mxu0 %v390
  %412 = vmatprep.subr.mxu0 0.0
  %413 = vmatpush1.msra.mxu0 %v389
  %414 = vmatprep.subr.mxu0 0.0
  %415 = vmatpush1.msra.mxu0 %v388
  %416 = vmatprep.subr.mxu0 0.0
  %417 = vmatpush1.msra.mxu0 %v387
  %418 = vmatprep.subr.mxu0 0.0
  %419 = vmatpush1.msra.mxu0 %v386
  %420 = vmatprep.subr.mxu0 0.0
  %421 = vmatpush1.msra.mxu0 %v385
  %422 = vmatprep.subr.mxu0 0.0
  %423 = vmatpush1.msra.mxu0 %v384
  %424 = vmatprep.subr.mxu0 0.0
  %425 = vmatpush1.msra.mxu0 %v383
  %426 = vmatprep.subr.mxu0 0.0
  %427 = vmatpush1.msra.mxu0 %v382
  %428 = vmatprep.subr.mxu0 0.0
  %429 = vmatpush1.msra.mxu0 %v381
  %430 = vmatprep.subr.mxu0 0.0
  %431 = vmatpush2.msra.mxu0 0.0
  %432 = vmatprep.subr.mxu0 0.0
  %433 = vmatpush2.msra.mxu0 0.0
  %434 = vmatprep.subr.mxu0 0.0
  %435 = vmatpush2.msra.mxu0 0.0
  %436 = vmatprep.subr.mxu0 0.0
  %437 = vmatpush2.msra.mxu0 0.0
  %438 = vmatprep.subr.mxu0 0.0
  %439 = vmatpush2.msra.mxu0 0.0
  %440 = vmatprep.subr.mxu0 0.0
  %441 = vmatpush2.msra.mxu0 0.0
  %442 = vmatprep.subr.mxu0 0.0
  %443 = vmatpush2.msra.mxu0 0.0
  %444 = vmatprep.subr.mxu0 0.0
  %445 = vmatpush2.msra.mxu0 0.0
  %446 = vmatprep.subr.mxu0 0.0
  %447 = vmatpush2.msra.mxu0 0.0
  %448 = vmatprep.subr.mxu0 0.0
  %449 = vmatpush2.msra.mxu0 0.0
  %450 = vmatprep.subr.mxu0 0.0
  %451 = vmatpush2.msra.mxu0 0.0
  %452 = vmatprep.subr.mxu0 0.0
  %453 = vmatpush2.msra.mxu0 0.0
  %454 = vmatprep.subr.mxu0 0.0
  %455 = vmatpush2.msra.mxu0 0.0
  %456 = vmatprep.subr.mxu0 0.0
  %457 = vmatpush2.msra.mxu0 0.0
  %458 = vmatprep.subr.mxu0 0.0
  %459 = vmatpush2.msra.mxu0 0.0
  %460 = vmatprep.subr.mxu0 0.0
  %461 = vmatpush2.msra.mxu0 0.0
  %462 = vmatprep.mubr.f32.mxu0 0.0
  %463 = vmatmul.mubr.f32.gmra.mxu0 %v373
  %v464 = vpop.f32.mrf.mxu0
  %v465 = vadd.f32 %v397, %v464
  %v466 = vpop.f32.mrf.mxu0
  %467 = vmatprep.mubr.f32.mxu0 0.0
  %468 = vmatmul.mubr.f32.gmra.mxu0 %v374
  %v469 = vpop.f32.mrf.mxu0
  %v470 = vadd.f32 %v397, %v469
  %v471 = vpop.f32.mrf.mxu0
  %472 = vmatprep.mubr.f32.mxu0 0.0
  %473 = vmatmul.mubr.f32.gmra.mxu0 %v375
  %v474 = vpop.f32.mrf.mxu0
  %v475 = vadd.f32 %v397, %v474
  %v476 = vpop.f32.mrf.mxu0
  %477 = vmatprep.mubr.f32.mxu0 0.0
  %478 = vmatmul.mubr.f32.gmra.mxu0 %v376
  %v479 = vpop.f32.mrf.mxu0
  %v480 = vadd.f32 %v397, %v479
  %v481 = vpop.f32.mrf.mxu0
  %482 = vmatprep.mubr.f32.mxu0 0.0
  %483 = vmatmul.mubr.f32.gmra.mxu0 %v377
  %v484 = vpop.f32.mrf.mxu0
  %v485 = vadd.f32 %v397, %v484
  %v486 = vpop.f32.mrf.mxu0
  %487 = vmatprep.mubr.f32.mxu0 0.0
  %488 = vmatmul.mubr.f32.gmra.mxu0 %v378
  %v489 = vpop.f32.mrf.mxu0
  %v490 = vadd.f32 %v397, %v489
  %v491 = vpop.f32.mrf.mxu0
  %492 = vmatprep.mubr.f32.mxu0 0.0
  %493 = vmatmul.mubr.f32.gmra.mxu0 %v379
  %v494 = vpop.f32.mrf.mxu0
  %v495 = vadd.f32 %v397, %v494
  %v496 = vpop.f32.mrf.mxu0
  %497 = vmatprep.mubr.f32.mxu0 0.0
  %498 = vmatmul.mubr.f32.gmra.mxu0 %v380
  %v499 = vpop.f32.mrf.mxu0
  %v500 = vadd.f32 %v397, %v499
  %v501 = vpop.f32.mrf.mxu0
  %502 = vdwg.mxu0
  %v503 = vmax.f32 %v465, 0.0
  %v504 = vmax.f32 %v470, 0.0
  %v505 = vmax.f32 %v475, 0.0
  %v506 = vmax.f32 %v480, 0.0
  %v507 = vmax.f32 %v485, 0.0
  %v508 = vmax.f32 %v490, 0.0
  %v509 = vmax.f32 %v495, 0.0
  %v510 = vmax.f32 %v500, 0.0
  %v511 = vld [vmem:[%s4] sm:$0xff]
  %v512 = vld [vmem:[%s4 + $0x8] sm:$0xff]
  %v513 = vld [vmem:[%s4 + $0x10] sm:$0xff]
  %v514 = vld [vmem:[%s4 + $0x18] sm:$0xff]
  %v515 = vld [vmem:[%s4 + $0x20] sm:$0xff]
  %v516 = vld [vmem:[%s4 + $0x28] sm:$0xff]
  %v517 = vld [vmem:[%s4 + $0x30] sm:$0xff]
  %v518 = vld [vmem:[%s4 + $0x38] sm:$0xff]
  %v519 = vld [vmem:[%s4 + $0x40] sm:$0xff]
  %v520 = vld [vmem:[%s4 + $0x48] sm:$0xff]
  %v521 = vld [vmem:[%s4 + $0x50] sm:$0xff]
  %v522 = vld [vmem:[%s4 + $0x58] sm:$0xff]
  %v523 = vld [vmem:[%s4 + $0x60] sm:$0xff]
  %v524 = vld [vmem:[%s4 + $0x68] sm:$0xff]
  %v525 = vld [vmem:[%s4 + $0x70] sm:$0xff]
  %v526 = vld [vmem:[%s4 + $0x78] sm:$0xff]
  %v527 = vld [vmem:[%s7 + $0x3] ss:$0 sm:$0xff]
  %528 = vmatprep.subr.mxu0 0.0
  %529 = vmatpush1.msra.mxu0 %v526
  %530 = vmatprep.subr.mxu0 0.0
  %531 = vmatpush1.msra.mxu0 %v525
  %532 = vmatprep.subr.mxu0 0.0
  %533 = vmatpush1.msra.mxu0 %v524
  %534 = vmatprep.subr.mxu0 0.0
  %535 = vmatpush1.msra.mxu0 %v523
  %536 = vmatprep.subr.mxu0 0.0
  %537 = vmatpush1.msra.mxu0 %v522
  %538 = vmatprep.subr.mxu0 0.0
  %539 = vmatpush1.msra.mxu0 %v521
  %540 = vmatprep.subr.mxu0 0.0
  %541 = vmatpush1.msra.mxu0 %v520
  %542 = vmatprep.subr.mxu0 0.0
  %543 = vmatpush1.msra.mxu0 %v519
  %544 = vmatprep.subr.mxu0 0.0
  %545 = vmatpush1.msra.mxu0 %v518
  %546 = vmatprep.subr.mxu0 0.0
  %547 = vmatpush1.msra.mxu0 %v517
  %548 = vmatprep.subr.mxu0 0.0
  %549 = vmatpush1.msra.mxu0 %v516
  %550 = vmatprep.subr.mxu0 0.0
  %551 = vmatpush1.msra.mxu0 %v515
  %552 = vmatprep.subr.mxu0 0.0
  %553 = vmatpush1.msra.mxu0 %v514
  %554 = vmatprep.subr.mxu0 0.0
  %555 = vmatpush1.msra.mxu0 %v513
  %556 = vmatprep.subr.mxu0 0.0
  %557 = vmatpush1.msra.mxu0 %v512
  %558 = vmatprep.subr.mxu0 0.0
  %559 = vmatpush1.msra.mxu0 %v511
  %560 = vmatprep.subr.mxu0 0.0
  %561 = vmatpush2.msra.mxu0 0.0
  %562 = vmatprep.subr.mxu0 0.0
  %563 = vmatpush2.msra.mxu0 0.0
  %564 = vmatprep.subr.mxu0 0.0
  %565 = vmatpush2.msra.mxu0 0.0
  %566 = vmatprep.subr.mxu0 0.0
  %567 = vmatpush2.msra.mxu0 0.0
  %568 = vmatprep.subr.mxu0 0.0
  %569 = vmatpush2.msra.mxu0 0.0
  %570 = vmatprep.subr.mxu0 0.0
  %571 = vmatpush2.msra.mxu0 0.0
  %572 = vmatprep.subr.mxu0 0.0
  %573 = vmatpush2.msra.mxu0 0.0
  %574 = vmatprep.subr.mxu0 0.0
  %575 = vmatpush2.msra.mxu0 0.0
  %576 = vmatprep.subr.mxu0 0.0
  %577 = vmatpush2.msra.mxu0 0.0
  %578 = vmatprep.subr.mxu0 0.0
  %579 = vmatpush2.msra.mxu0 0.0
  %580 = vmatprep.subr.mxu0 0.0
  %581 = vmatpush2.msra.mxu0 0.0
  %582 = vmatprep.subr.mxu0 0.0
  %583 = vmatpush2.msra.mxu0 0.0
  %584 = vmatprep.subr.mxu0 0.0
  %585 = vmatpush2.msra.mxu0 0.0
  %586 = vmatprep.subr.mxu0 0.0
  %587 = vmatpush2.msra.mxu0 0.0
  %588 = vmatprep.subr.mxu0 0.0
  %589 = vmatpush2.msra.mxu0 0.0
  %590 = vmatprep.subr.mxu0 0.0
  %591 = vmatpush2.msra.mxu0 0.0
  %592 = vmatprep.mubr.f32.mxu0 0.0
  %593 = vmatmul.mubr.f32.gmra.mxu0 %v503
  %v594 = vpop.f32.mrf.mxu0
  %v595 = vadd.f32 %v527, %v594
  %v596 = vpop.f32.mrf.mxu0
  %597 = vmatprep.mubr.f32.mxu0 0.0
  %598 = vmatmul.mubr.f32.gmra.mxu0 %v504
  %v599 = vpop.f32.mrf.mxu0
  %v600 = vadd.f32 %v527, %v599
  %v601 = vpop.f32.mrf.mxu0
  %602 = vmatprep.mubr.f32.mxu0 0.0
  %603 = vmatmul.mubr.f32.gmra.mxu0 %v505
  %v604 = vpop.f32.mrf.mxu0
  %v605 = vadd.f32 %v527, %v604
  %v606 = vpop.f32.mrf.mxu0
  %607 = vmatprep.mubr.f32.mxu0 0.0
  %608 = vmatmul.mubr.f32.gmra.mxu0 %v506
  %v609 = vpop.f32.mrf.mxu0
  %v610 = vadd.f32 %v527, %v609
  %v611 = vpop.f32.mrf.mxu0
  %612 = vmatprep.mubr.f32.mxu0 0.0
  %613 = vmatmul.mubr.f32.gmra.mxu0 %v507
  %v614 = vpop.f32.mrf.mxu0
  %v615 = vadd.f32 %v527, %v614
  %v616 = vpop.f32.mrf.mxu0
  %617 = vmatprep.mubr.f32.mxu0 0.0
  %618 = vmatmul.mubr.f32.gmra.mxu0 %v508
  %v619 = vpop.f32.mrf.mxu0
  %v620 = vadd.f32 %v527, %v619
  %v621 = vpop.f32.mrf.mxu0
  %622 = vmatprep.mubr.f32.mxu0 0.0
  %623 = vmatmul.mubr.f32.gmra.mxu0 %v509
  %v624 = vpop.f32.mrf.mxu0
  %v625 = vadd.f32 %v527, %v624
  %v626 = vpop.f32.mrf.mxu0
  %627 = vmatprep.mubr.f32.mxu0 0.0
  %628 = vmatmul.mubr.f32.gmra.mxu0 %v510
  %v629 = vpop.f32.mrf.mxu0
  %v630 = vadd.f32 %v527, %v629
  %v631 = vpop.f32.mrf.mxu0
  %632 = vdwg.mxu0
  %v633 = vmax.f32 %v595, 0.0
  %v634 = vmax.f32 %v600, 0.0
  %v635 = vmax.f32 %v605, 0.0
  %v636 = vmax.f32 %v610, 0.0
  %v637 = vmax.f32 %v615, 0.0
  %v638 = vmax.f32 %v620, 0.0
  %v639 = vmax.f32 %v625, 0.0
  %v640 = vmax.f32 %v630, 0.0
  %v641 = vld [vmem:[%s5] sm:$0xff]
  %v642 = vld [vmem:[%s5 + $0x8] sm:$0xff]
  %v643 = vld [vmem:[%s5 + $0x10] sm:$0xff]
  %v644 = vld [vmem:[%s5 + $0x18] sm:$0xff]
  %v645 = vld [vmem:[%s5 + $0x20] sm:$0xff]
  %v646 = vld [vmem:[%s5 + $0x28] sm:$0xff]
  %v647 = vld [vmem:[%s5 + $0x30] sm:$0xff]
  %v648 = vld [vmem:[%s5 + $0x38] sm:$0xff]
  %v649 = vld [vmem:[%s5 + $0x40] sm:$0xff]
  %v650 = vld [vmem:[%s5 + $0x48] sm:$0xff]
  %v651 = vld [vmem:[%s5 + $0x50] sm:$0xff]
  %v652 = vld [vmem:[%s5 + $0x58] sm:$0xff]
  %v653 = vld [vmem:[%s5 + $0x60] sm:$0xff]
  %v654 = vld [vmem:[%s5 + $0x68] sm:$0xff]
  %v655 = vld [vmem:[%s5 + $0x70] sm:$0xff]
  %v656 = vld [vmem:[%s5 + $0x78] sm:$0xff]
  %v657 = vld [vmem:[%s7 + $0x4] ss:$0 sm:$0xff]
  %658 = vmatprep.subr.mxu0 0.0
  %659 = vmatpush1.msra.mxu0 %v656
  %660 = vmatprep.subr.mxu0 0.0
  %661 = vmatpush1.msra.mxu0 %v655
  %662 = vmatprep.subr.mxu0 0.0
  %663 = vmatpush1.msra.mxu0 %v654
  %664 = vmatprep.subr.mxu0 0.0
  %665 = vmatpush1.msra.mxu0 %v653
  %666 = vmatprep.subr.mxu0 0.0
  %667 = vmatpush1.msra.mxu0 %v652
  %668 = vmatprep.subr.mxu0 0.0
  %669 = vmatpush1.msra.mxu0 %v651
  %670 = vmatprep.subr.mxu0 0.0
  %671 = vmatpush1.msra.mxu0 %v650
  %672 = vmatprep.subr.mxu0 0.0
  %673 = vmatpush1.msra.mxu0 %v649
  %674 = vmatprep.subr.mxu0 0.0
  %675 = vmatpush1.msra.mxu0 %v648
  %676 = vmatprep.subr.mxu0 0.0
  %677 = vmatpush1.msra.mxu0 %v647
  %678 = vmatprep.subr.mxu0 0.0
  %679 = vmatpush1.msra.mxu0 %v646
  %680 = vmatprep.subr.mxu0 0.0
  %681 = vmatpush1.msra.mxu0 %v645
  %682 = vmatprep.subr.mxu0 0.0
  %683 = vmatpush1.msra.mxu0 %v644
  %684 = vmatprep.subr.mxu0 0.0
  %685 = vmatpush1.msra.mxu0 %v643
  %686 = vmatprep.subr.mxu0 0.0
  %687 = vmatpush1.msra.mxu0 %v642
  %688 = vmatprep.subr.mxu0 0.0
  %689 = vmatpush1.msra.mxu0 %v641
  %690 = vmatprep.subr.mxu0 0.0
  %691 = vmatpush2.msra.mxu0 0.0
  %692 = vmatprep.subr.mxu0 0.0
  %693 = vmatpush2.msra.mxu0 0.0
  %694 = vmatprep.subr.mxu0 0.0
  %695 = vmatpush2.msra.mxu0 0.0
  %696 = vmatprep.subr.mxu0 0.0
  %697 = vmatpush2.msra.mxu0 0.0
  %698 = vmatprep.subr.mxu0 0.0
  %699 = vmatpush2.msra.mxu0 0.0
  %700 = vmatprep.subr.mxu0 0.0
  %701 = vmatpush2.msra.mxu0 0.0
  %702 = vmatprep.subr.mxu0 0.0
  %703 = vmatpush2.msra.mxu0 0.0
  %704 = vmatprep.subr.mxu0 0.0
  %705 = vmatpush2.msra.mxu0 0.0
  %706 = vmatprep.subr.mxu0 0.0
  %707 = vmatpush2.msra.mxu0 0.0
  %708 = vmatprep.subr.mxu0 0.0
  %709 = vmatpush2.msra.mxu0 0.0
  %710 = vmatprep.subr.mxu0 0.0
  %711 = vmatpush2.msra.mxu0 0.0
  %712 = vmatprep.subr.mxu0 0.0
  %713 = vmatpush2.msra.mxu0 0.0
  %714 = vmatprep.subr.mxu0 0.0
  %715 = vmatpush2.msra.mxu0 0.0
  %716 = vmatprep.subr.mxu0 0.0
  %717 = vmatpush2.msra.mxu0 0.0
  %718 = vmatprep.subr.mxu0 0.0
  %719 = vmatpush2.msra.mxu0 0.0
  %720 = vmatprep.subr.mxu0 0.0
  %721 = vmatpush2.msra.mxu0 0.0
  %722 = vmatprep.mubr.f32.mxu0 0.0
  %723 = vmatmul.mubr.f32.gmra.mxu0 %v633
  %v724 = vpop.f32.mrf.mxu0
  %v725 = vadd.f32 %v657, %v724
  %v726 = vpop.f32.mrf.mxu0
  %727 = vmatprep.mubr.f32.mxu0 0.0
  %728 = vmatmul.mubr.f32.gmra.mxu0 %v634
  %v729 = vpop.f32.mrf.mxu0
  %v730 = vadd.f32 %v657, %v729
  %v731 = vpop.f32.mrf.mxu0
  %732 = vmatprep.mubr.f32.mxu0 0.0
  %733 = vmatmul.mubr.f32.gmra.mxu0 %v635
  %v734 = vpop.f32.mrf.mxu0
  %v735 = vadd.f32 %v657, %v734
  %v736 = vpop.f32.mrf.mxu0
  %737 = vmatprep.mubr.f32.mxu0 0.0
  %738 = vmatmul.mubr.f32.gmra.mxu0 %v636
  %v739 = vpop.f32.mrf.mxu0
  %v740 = vadd.f32 %v657, %v739
  %v741 = vpop.f32.mrf.mxu0
  %742 = vmatprep.mubr.f32.mxu0 0.0
  %743 = vmatmul.mubr.f32.gmra.mxu0 %v637
  %v744 = vpop.f32.mrf.mxu0
  %v745 = vadd.f32 %v657, %v744
  %v746 = vpop.f32.mrf.mxu0
  %747 = vmatprep.mubr.f32.mxu0 0.0
  %748 = vmatmul.mubr.f32.gmra.mxu0 %v638
  %v749 = vpop.f32.mrf.mxu0
  %v750 = vadd.f32 %v657, %v749
  %v751 = vpop.f32.mrf.mxu0
  %752 = vmatprep.mubr.f32.mxu0 0.0
  %753 = vmatmul.mubr.f32.gmra.mxu0 %v639
  %v754 = vpop.f32.mrf.mxu0
  %v755 = vadd.f32 %v657, %v754
  %v756 = vpop.f32.mrf.mxu0
  %757 = vmatprep.mubr.f32.mxu0 0.0
  %758 = vmatmul.mubr.f32.gmra.mxu0 %v640
  %v759 = vpop.f32.mrf.mxu0
  %v760 = vadd.f32 %v657, %v759
  %v761 = vpop.f32.mrf.mxu0
  %762 = vdwg.mxu0
  %v763 = vmax.f32 %v725, 0.0
  %v764 = vmax.f32 %v730, 0.0
  %v765 = vmax.f32 %v735, 0.0
  %v766 = vmax.f32 %v740, 0.0
  %v767 = vmax.f32 %v745, 0.0
  %v768 = vmax.f32 %v750, 0.0
  %v769 = vmax.f32 %v755, 0.0
  %v770 = vmax.f32 %v760, 0.0
  %v771 = vld [vmem:[%s6] sm:$0xff]
  %v772 = vld [vmem:[%s6 + $0x8] sm:$0xff]
  %v773 = vld [vmem:[%s6 + $0x10] sm:$0xff]
  %v774 = vld [vmem:[%s6 + $0x18] sm:$0xff]
  %v775 = vld [vmem:[%s6 + $0x20] sm:$0xff]
  %v776 = vld [vmem:[%s6 + $0x28] sm:$0xff]
  %v777 = vld [vmem:[%s6 + $0x30] sm:$0xff]
  %v778 = vld [vmem:[%s6 + $0x38] sm:$0xff]
  %v779 = vld [vmem:[%s6 + $0x40] sm:$0xff]
  %v780 = vld [vmem:[%s6 + $0x48] sm:$0xff]
  %v781 = vld [vmem:[%s6 + $0x50] sm:$0xff]
  %v782 = vld [vmem:[%s6 + $0x58] sm:$0xff]
  %v783 = vld [vmem:[%s6 + $0x60] sm:$0xff]
  %v784 = vld [vmem:[%s6 + $0x68] sm:$0xff]
  %v785 = vld [vmem:[%s6 + $0x70] sm:$0xff]
  %v786 = vld [vmem:[%s6 + $0x78] sm:$0xff]
  %v787 = vld [vmem:[%s7 + $0x5] ss:$0 sm:$0xff]
  %788 = vmatprep.subr.mxu0 0.0
  %789 = vmatpush1.msra.mxu0 %v786
  %790 = vmatprep.subr.mxu0 0.0
  %791 = vmatpush1.msra.mxu0 %v785
  %792 = vmatprep.subr.mxu0 0.0
  %793 = vmatpush1.msra.mxu0 %v784
  %794 = vmatprep.subr.mxu0 0.0
  %795 = vmatpush1.msra.mxu0 %v783
  %796 = vmatprep.subr.mxu0 0.0
  %797 = vmatpush1.msra.mxu0 %v782
  %798 = vmatprep.subr.mxu0 0.0
  %799 = vmatpush1.msra.mxu0 %v781
  %800 = vmatprep.subr.mxu0 0.0
  %801 = vmatpush1.msra.mxu0 %v780
  %802 = vmatprep.subr.mxu0 0.0
  %803 = vmatpush1.msra.mxu0 %v779
  %804 = vmatprep.subr.mxu0 0.0
  %805 = vmatpush1.msra.mxu0 %v778
  %806 = vmatprep.subr.mxu0 0.0
  %807 = vmatpush1.msra.mxu0 %v777
  %808 = vmatprep.subr.mxu0 0.0
  %809 = vmatpush1.msra.mxu0 %v776
  %810 = vmatprep.subr.mxu0 0.0
  %811 = vmatpush1.msra.mxu0 %v775
  %812 = vmatprep.subr.mxu0 0.0
  %813 = vmatpush1.msra.mxu0 %v774
  %814 = vmatprep.subr.mxu0 0.0
  %815 = vmatpush1.msra.mxu0 %v773
  %816 = vmatprep.subr.mxu0 0.0
  %817 = vmatpush1.msra.mxu0 %v772
  %818 = vmatprep.subr.mxu0 0.0
  %819 = vmatpush1.msra.mxu0 %v771
  %820 = vmatprep.subr.mxu0 0.0
  %821 = vmatpush2.msra.mxu0 0.0
  %822 = vmatprep.subr.mxu0 0.0
  %823 = vmatpush2.msra.mxu0 0.0
  %824 = vmatprep.subr.mxu0 0.0
  %825 = vmatpush2.msra.mxu0 0.0
  %826 = vmatprep.subr.mxu0 0.0
  %827 = vmatpush2.msra.mxu0 0.0
  %828 = vmatprep.subr.mxu0 0.0
  %829 = vmatpush2.msra.mxu0 0.0
  %830 = vmatprep.subr.mxu0 0.0
  %831 = vmatpush2.msra.mxu0 0.0
  %832 = vmatprep.subr.mxu0 0.0
  %833 = vmatpush2.msra.mxu0 0.0
  %834 = vmatprep.subr.mxu0 0.0
  %835 = vmatpush2.msra.mxu0 0.0
  %836 = vmatprep.subr.mxu0 0.0
  %837 = vmatpush2.msra.mxu0 0.0
  %838 = vmatprep.subr.mxu0 0.0
  %839 = vmatpush2.msra.mxu0 0.0
  %840 = vmatprep.subr.mxu0 0.0
  %841 = vmatpush2.msra.mxu0 0.0
  %842 = vmatprep.subr.mxu0 0.0
  %843 = vmatpush2.msra.mxu0 0.0
  %844 = vmatprep.subr.mxu0 0.0
  %845 = vmatpush2.msra.mxu0 0.0
  %846 = vmatprep.subr.mxu0 0.0
  %847 = vmatpush2.msra.mxu0 0.0
  %848 = vmatprep.subr.mxu0 0.0
  %849 = vmatpush2.msra.mxu0 0.0
  %850 = vmatprep.subr.mxu0 0.0
  %851 = vmatpush2.msra.mxu0 0.0
  %852 = vmatprep.mubr.f32.mxu0 0.0
  %853 = vmatmul.mubr.f32.gmra.mxu0 %v763
  %v854 = vpop.f32.mrf.mxu0
  %v855 = vadd.f32 %v787, %v854
  %v856 = vpop.f32.mrf.mxu0
  %857 = vmatprep.mubr.f32.mxu0 0.0
  %858 = vmatmul.mubr.f32.gmra.mxu0 %v764
  %v859 = vpop.f32.mrf.mxu0
  %v860 = vadd.f32 %v787, %v859
  %v861 = vpop.f32.mrf.mxu0
  %862 = vmatprep.mubr.f32.mxu0 0.0
  %863 = vmatmul.mubr.f32.gmra.mxu0 %v765
  %v864 = vpop.f32.mrf.mxu0
  %v865 = vadd.f32 %v787, %v864
  %v866 = vpop.f32.mrf.mxu0
  %867 = vmatprep.mubr.f32.mxu0 0.0
  %868 = vmatmul.mubr.f32.gmra.mxu0 %v766
  %v869 = vpop.f32.mrf.mxu0
  %v870 = vadd.f32 %v787, %v869
  %v871 = vpop.f32.mrf.mxu0
  %872 = vmatprep.mubr.f32.mxu0 0.0
  %873 = vmatmul.mubr.f32.gmra.mxu0 %v767
  %v874 = vpop.f32.mrf.mxu0
  %v875 = vadd.f32 %v787, %v874
  %v876 = vpop.f32.mrf.mxu0
  %877 = vmatprep.mubr.f32.mxu0 0.0
  %878 = vmatmul.mubr.f32.gmra.mxu0 %v768
  %v879 = vpop.f32.mrf.mxu0
  %v880 = vadd.f32 %v787, %v879
  %v881 = vpop.f32.mrf.mxu0
  %882 = vmatprep.mubr.f32.mxu0 0.0
  %883 = vmatmul.mubr.f32.gmra.mxu0 %v769
  %v884 = vpop.f32.mrf.mxu0
  %v885 = vadd.f32 %v787, %v884
  %v886 = vpop.f32.mrf.mxu0
  %887 = vmatprep.mubr.f32.mxu0 0.0
  %888 = vmatmul.mubr.f32.gmra.mxu0 %v770
  %v889 = vpop.f32.mrf.mxu0
  %v890 = vadd.f32 %v787, %v889
  %v891 = vpop.f32.mrf.mxu0
  %892 = vdwg.mxu0
  %893 = vmax.xlane.f32.xlu0 %v855
  %v894 = vpop.xlane.xlu0 %893
  %895 = vmax.xlane.f32.xlu0 %v860
  %v896 = vpop.xlane.xlu0 %895
  %897 = vmax.xlane.f32.xlu0 %v865
  %v898 = vpop.xlane.xlu0 %897
  %899 = vmax.xlane.f32.xlu0 %v870
  %v900 = vpop.xlane.xlu0 %899
  %901 = vmax.xlane.f32.xlu0 %v875
  %v902 = vpop.xlane.xlu0 %901
  %903 = vmax.xlane.f32.xlu0 %v880
  %v904 = vpop.xlane.xlu0 %903
  %905 = vmax.xlane.f32.xlu0 %v885
  %v906 = vpop.xlane.xlu0 %905
  %907 = vmax.xlane.f32.xlu0 %v890
  %v908 = vpop.xlane.xlu0 %907
  %v909 = vsub.f32 %v855, %v894
  %v910 = vsub.f32 %v860, %v896
  %v911 = vsub.f32 %v865, %v898
  %v912 = vsub.f32 %v870, %v900
  %v913 = vsub.f32 %v875, %v902
  %v914 = vsub.f32 %v880, %v904
  %v915 = vsub.f32 %v885, %v906
  %v916 = vsub.f32 %v890, %v908
  %v917 = vmul.f32 %v909, 1.442695
  %v918 = vpow.pop %v917
  %v919 = vmul.f32 %v910, 1.442695
  %v920 = vpow.pop %v919
  %v921 = vmul.f32 %v911, 1.442695
  %v922 = vpow.pop %v921
  %v923 = vmul.f32 %v912, 1.442695
  %v924 = vpow.pop %v923
  %v925 = vmul.f32 %v913, 1.442695
  %v926 = vpow.pop %v925
  %v927 = vmul.f32 %v914, 1.442695
  %v928 = vpow.pop %v927
  %v929 = vmul.f32 %v915, 1.442695
  %v930 = vpow.pop %v929
  %v931 = vmul.f32 %v916, 1.442695
  %v932 = vpow.pop %v931
  %933 = vadd.xlane.f32.xlu0 %v918
  %v934 = vpop.xlane.xlu0 %933
  %935 = vadd.xlane.f32.xlu0 %v920
  %v936 = vpop.xlane.xlu0 %935
  %937 = vadd.xlane.f32.xlu0 %v922
  %v938 = vpop.xlane.xlu0 %937
  %939 = vadd.xlane.f32.xlu0 %v924
  %v940 = vpop.xlane.xlu0 %939
  %941 = vadd.xlane.f32.xlu0 %v926
  %v942 = vpop.xlane.xlu0 %941
  %943 = vadd.xlane.f32.xlu0 %v928
  %v944 = vpop.xlane.xlu0 %943
  %945 = vadd.xlane.f32.xlu0 %v930
  %v946 = vpop.xlane.xlu0 %945
  %947 = vadd.xlane.f32.xlu0 %v932
  %v948 = vpop.xlane.xlu0 %947
  %v949 = vrcp.pop %v934
  %v950 = vrcp.pop %v936
  %v951 = vrcp.pop %v938
  %v952 = vrcp.pop %v940
  %v953 = vrcp.pop %v942
  %v954 = vrcp.pop %v944
  %v955 = vrcp.pop %v946
  %v956 = vrcp.pop %v948
  %v957 = vmul.f32 %v918, %v949
  %v958 = vmul.f32 %v920, %v950
  %v959 = vmul.f32 %v922, %v951
  %v960 = vmul.f32 %v924, %v952
  %v961 = vmul.f32 %v926, %v953
  %v962 = vmul.f32 %v928, %v954
  %v963 = vmul.f32 %v930, %v955
  %v964 = vmul.f32 %v932, %v956
  %vm965 = vcmask 72704
  %966 = vst.msk [vmem:[%s8] sm:$0xff] %vm965, %v957
  %967 = vst.msk [vmem:[%s8 + $0x8] sm:$0xff] %vm965, %v958
  %968 = vst.msk [vmem:[%s8 + $0x10] sm:$0xff] %vm965, %v959
  %969 = vst.msk [vmem:[%s8 + $0x18] sm:$0xff] %vm965, %v960
  %970 = vst.msk [vmem:[%s8 + $0x20] sm:$0xff] %vm965, %v961
  %971 = vst.msk [vmem:[%s8 + $0x28] sm:$0xff] %vm965, %v962
  %972 = vst.msk [vmem:[%s8 + $0x30] sm:$0xff] %vm965, %v963
  %973 = vst.msk [vmem:[%s8 + $0x38] sm:$0xff] %vm965, %v964
  // Predicated region
  $region34: #{otto_mlp_forward.1} parent=0 // pred_check
    _
  $region35: #{otto_mlp_forward.1} parent=0 // pred_check_branch
    %975 = sbr.rel (0) target = $region37
  $region36: #{otto_mlp_forward.1} parent=0 // pred_region
    _
  $region37: #{otto_mlp_forward.1} parent=0 // pred_fallthru
    _
  // Predicated region
  $region38: #{otto_mlp_forward.1} parent=0 // pred_check
    _
  $region39: #{otto_mlp_forward.1} parent=0 // pred_check_branch
    %977 = sbr.rel (0) target = $region41
  $region40: #{otto_mlp_forward.1} parent=0 // pred_region
    _
  $region41: #{otto_mlp_forward.1} parent=0 // pred_fallthru
    _

</llo_original>
